<compile_context>
chip_gen: v7x
topology: tpu7x:2x2x1
jax: 0.10.0
libtpu: 0.0.40
codegen_flags: <defaults>
</compile_context>

<pallas_src>
import jax
import jax.numpy as jnp
from jax.experimental import pallas as pl
from jax.experimental.pallas import tpu as pltpu


def _make_sequence_loss_kernel(max_flow_sq: float, n_block: int, compute_dtype):
    """Kernel body. grid = (num_h_tiles, N // n_block); axis 1 accumulates."""

    def kernel(w_ref, pred_ref, gt_ref, valid_ref, out_ref, mask_ref):
        n_outer = pl.program_id(1)

        # Ref-level channel slices (no full (B, 2, bh, W) f32 temporary).
        gt_u = gt_ref[:, 0].astype(compute_dtype)            # (B, bh, W)
        gt_v = gt_ref[:, 1].astype(compute_dtype)

        # First inner step of this spatial tile: zero the resident output
        # accumulator and build the validity mask once.  The sqrt-free compare
        # (u^2 + v^2 < max_flow^2) is done in f32 on the already-loaded
        # channel values (exact for bf16 inputs), so the mask matches the
        # full-precision reference exactly.
        @pl.when(n_outer == 0)
        def _():
            out_ref[...] = jnp.zeros_like(out_ref)
            gu = gt_u.astype(jnp.float32)
            gv = gt_v.astype(jnp.float32)
            mag_sq = gu * gu + gv * gv
            ok = jnp.logical_and(
                valid_ref[...].astype(jnp.float32) >= 0.5,
                mag_sq < max_flow_sq)
            mask_ref[...] = ok.astype(mask_ref.dtype)

        mask = mask_ref[...]                                  # (B, bh, W)
        B, bh, W = mask.shape
        out_rows = out_ref.shape[0]
        groups = (B * bh) // out_rows

        acc = jnp.zeros((out_rows, W), jnp.float32)
        for j in range(n_block):                              # static, unrolled
            p_u = pred_ref[j, :, 0].astype(compute_dtype)     # (B, bh, W)
            p_v = pred_ref[j, :, 1].astype(compute_dtype)
            diff = jnp.abs(p_u - gt_u) + jnp.abs(p_v - gt_v)
            md = (mask * diff).astype(jnp.float32)            # f32 before reduce
            # Fold over batch and over sublane groups -> small (out_rows, W).
            partial = jnp.sum(md.reshape(groups, out_rows, W), axis=0)
            acc = acc + w_ref[n_outer * n_block + j] * partial
        out_ref[...] = out_ref[...] + acc

    return kernel


def _choose_block_h(H: int, per_row_bytes: int, target_bytes: int = 4 << 20) -> int:
    """Largest multiple-of-8 divisor of H whose per-prediction tile fits
    target_bytes, capped at H//2 so >= 2 spatial tiles remain (v7x megacore).
    Falls back to the full extent when H is not a multiple of 8."""
    if H % 8 != 0:
        return H
    divs = [h for h in range(8, H + 1, 8) if H % h == 0]
    cands = [h for h in divs if 2 * h <= H] or divs
    fitting = [h for h in cands if h * per_row_bytes <= target_bytes]
    return max(fitting) if fitting else min(cands)


def _choose_block_n(N: int, per_pred_bytes: int, target_bytes: int = 4 << 20) -> int:
    """Largest divisor of N whose combined pred block stays <= target_bytes
    (amortizes per-grid-step overhead for small images; 1 at big tiles)."""
    divs = [n for n in range(1, N + 1) if N % n == 0]
    fitting = [n for n in divs if n * per_pred_bytes <= target_bytes]
    return max(fitting) if fitting else 1


def sequence_loss(flow_preds, flow_gt, valid, *, gamma: float, max_flow: float,
                  block_h=None, block_n=None):
    """Pallas implementation of SequenceLoss.forward.

    Args:
      flow_preds: (N, B, 2, H, W) stacked flow predictions.
      flow_gt:    (B, 2, H, W) ground-truth flow  (== inputs['flows'][:, 0]).
      valid:      (B, 1, H, W) validity map       (== inputs['valids'][:, 0]).
    Returns:
      scalar float32 loss.
    """
    N, B, C, H, W = flow_preds.shape
    assert C == 2
    assert flow_gt.shape == (B, C, H, W)
    valid2d = valid.reshape(B, H, W)  # drop the size-1 channel axis

    pred_itemsize = jnp.dtype(flow_preds.dtype).itemsize
    gt_itemsize = jnp.dtype(flow_gt.dtype).itemsize
    val_itemsize = jnp.dtype(valid2d.dtype).itemsize

    # bf16 elementwise math when the model streams bf16 (v6e/v7x have bf16
    # VALU; on v5e Mosaic widens, which is merely neutral).  Mask scratch uses
    # the same dtype, halving its VMEM footprint in the bf16 case.
    if flow_preds.dtype == jnp.bfloat16 and flow_gt.dtype == jnp.bfloat16:
        compute_dtype = jnp.bfloat16
    else:
        compute_dtype = jnp.float32
    mask_itemsize = jnp.dtype(compute_dtype).itemsize

    if block_h is None:
        block_h = _choose_block_h(H, B * C * W * pred_itemsize)
    assert H % block_h == 0, (H, block_h)
    num_h_tiles = H // block_h

    per_pred_bytes = B * C * block_h * W * pred_itemsize
    if block_n is None:
        block_n = _choose_block_n(N, per_pred_bytes)
    assert N % block_n == 0, (N, block_n)
    grid_n = N // block_n

    out_rows = 8 if block_h % 8 == 0 else block_h

    # weight for prediction i is gamma ** (N - 1 - i); passed via scalar prefetch.
    weights = jnp.float32(gamma) ** jnp.arange(N - 1, -1, -1, dtype=jnp.float32)

    max_flow_f = float(max_flow)
    max_flow_sq = max_flow_f * max_flow_f if max_flow_f >= 0.0 else -1.0
    kernel = _make_sequence_loss_kernel(max_flow_sq, block_n, compute_dtype)

    # flow_preds is the only operand whose block index changes every inner
    # step; deepen its pipeline when the inner axis actually has > 1 step.
    pred_block = (block_n, B, C, block_h, W)
    pred_map = lambda s, n, ws: (n, 0, 0, s, 0)
    if grid_n >= 2:
        pred_spec = pl.BlockSpec(pred_block, pred_map, pipeline_mode=pl.Buffered(3))
        n_pred_buf = 3
    else:
        pred_spec = pl.BlockSpec(pred_block, pred_map)
        n_pred_buf = 2

    # VMEM budget estimate: multi-buffered blocks + mask scratch, with headroom.
    blk_bytes = (
        n_pred_buf * block_n * B * C * block_h * W * pred_itemsize   # pred
        + 2 * B * C * block_h * W * gt_itemsize                      # gt
        + 2 * B * block_h * W * val_itemsize                         # valid
        + 2 * out_rows * W * 4                                       # out
        + B * block_h * W * mask_itemsize)                           # mask scratch
    # Generation-aware cap: ~60% of per-core VMEM (v7x: 64 MiB -> ~38 MiB),
    # never above 48 MiB (comfortable on 128 MiB v5e/v6e).
    try:
        info = pltpu.get_tpu_info()
        vmem_cap = int(getattr(info, "vmem_capacity_bytes", 64 << 20))
    except Exception:
        vmem_cap = 64 << 20
    vmem_limit = int(min(max(2 * blk_bytes, 16 << 20),
                         min(48 << 20, (vmem_cap * 3) // 5)))

    out = pl.pallas_call(
        kernel,
        out_shape=jax.ShapeDtypeStruct((num_h_tiles * out_rows, W), jnp.float32),
        grid_spec=pltpu.PrefetchScalarGridSpec(
            num_scalar_prefetch=1,
            grid=(num_h_tiles, grid_n),
            in_specs=[
                # index_maps get the scalar-prefetch ref as a trailing arg.
                pred_spec,
                pl.BlockSpec((B, C, block_h, W), lambda s, n, ws: (0, 0, s, 0)),
                pl.BlockSpec((B, block_h, W), lambda s, n, ws: (0, s, 0)),
            ],
            out_specs=pl.BlockSpec((out_rows, W), lambda s, n, ws: (s, 0)),
            scratch_shapes=[pltpu.VMEM((B, block_h, W), compute_dtype)],
        ),
        compiler_params=pltpu.CompilerParams(
            dimension_semantics=("parallel", "arbitrary"),
            vmem_limit_bytes=vmem_limit,
        ),
    )(weights, flow_preds, flow_gt, valid2d)

    inv_count = 1.0 / float(B * C * H * W)
    return jnp.sum(out) * jnp.float32(inv_count)


def sequence_loss_ref(flow_preds, flow_gt, valid, *, gamma, max_flow):
    """Pure-JAX reference matching the PyTorch semantics."""
    n = flow_preds.shape[0]
    mag = jnp.sqrt(jnp.sum(flow_gt ** 2, axis=1, keepdims=True))
    v = jnp.logical_and(valid >= 0.5, mag < max_flow).astype(jnp.float32)
    loss = jnp.float32(0.0)
    for i in range(n):
        w = gamma ** (n - i - 1)
        loss = loss + w * jnp.mean(v * jnp.abs(flow_preds[i] - flow_gt))
    return loss


if __name__ == "__main__":
    # SequenceLoss has no learnable parameters; gamma / max_flow are the
    # deterministic __init__ hyper-parameters.
    gamma = 0.8
    key = jax.random.PRNGKey(0)
    k1, k2, k3, k4, k5, k6 = jax.random.split(key, 6)

    # --- Case 1: small f32 inputs, auto tiling (block_h=8, all N in one step). ---
    N, B, C, H, W = 8, 2, 2, 16, 16
    max_flow = 2.0  # small so both branches of the validity mask are exercised
    flow_preds = jax.random.normal(k1, (N, B, C, H, W), dtype=jnp.float32)
    flow_gt = jax.random.normal(k2, (B, C, H, W), dtype=jnp.float32)
    valid = jax.random.uniform(k3, (B, 1, H, W), dtype=jnp.float32)

    loss = sequence_loss(flow_preds, flow_gt, valid, gamma=gamma, max_flow=max_flow)
    loss = jax.block_until_ready(loss)
    ref = sequence_loss_ref(flow_preds, flow_gt, valid,
                            gamma=gamma, max_flow=max_flow)
    assert jnp.allclose(loss, ref, rtol=1e-5, atol=1e-6), (loss, ref)

    # --- Case 2: bf16 preds/gt streamed + computed in bf16, lane-dense W. ---
    N2, B2, H2, W2 = 6, 2, 32, 256
    max_flow2 = 1.5
    preds2 = jax.random.normal(k4, (N2, B2, 2, H2, W2),
                               dtype=jnp.float32).astype(jnp.bfloat16)
    gt2 = jax.random.normal(k5, (B2, 2, H2, W2),
                            dtype=jnp.float32).astype(jnp.bfloat16)
    valid2 = jax.random.uniform(k6, (B2, 1, H2, W2), dtype=jnp.float32)

    loss2 = sequence_loss(preds2, gt2, valid2, gamma=gamma, max_flow=max_flow2)
    loss2 = jax.block_until_ready(loss2)
    ref2 = sequence_loss_ref(preds2.astype(jnp.float32),
                             gt2.astype(jnp.float32), valid2,
                             gamma=gamma, max_flow=max_flow2)
    assert jnp.allclose(loss2, ref2, rtol=2e-3, atol=1e-4), (loss2, ref2)

    # --- Case 3: same bf16 data, explicit tiling that exercises the multi-step
    #     inner N axis (grid=(4,3)) and the Buffered(3) pred pipeline. ---
    loss3 = sequence_loss(preds2, gt2, valid2, gamma=gamma, max_flow=max_flow2,
                          block_h=8, block_n=2)
    loss3 = jax.block_until_ready(loss3)
    assert jnp.allclose(loss3, ref2, rtol=2e-3, atol=1e-4), (loss3, ref2)

    print("KERNEL_OK")
</pallas_src>

<mosaic_0001>
module attributes {stable_mosaic.version = 11 : i64} {
  func.func @kernel(%arg0: i32, %arg1: i32, %arg2: memref<8xf32, #tpu.memory_space<smem>>, %arg3: memref<8x2x2x8x16xf32, #tpu.memory_space<vmem>>, %arg4: memref<2x2x8x16xf32, #tpu.memory_space<vmem>>, %arg5: memref<2x8x16xf32, #tpu.memory_space<vmem>>, %arg6: memref<8x16xf32, #tpu.memory_space<vmem>>, %arg7: memref<2x8x16xf32, #tpu.memory_space<vmem>>) attributes {dimension_semantics = [#tpu.dimension_semantics<parallel>, #tpu.dimension_semantics<arbitrary>], iteration_bounds = array<i64: 2, 1>, scalar_prefetch = 1 : i64, scratch_operands = 1 : i64, tpu.core_type = #tpu.core_type<tc>, window_params = [{transform_indices = @transform_0, window_bounds = array<i64: 8, 2, 2, 8, 16>}, {transform_indices = @transform_1, window_bounds = array<i64: 2, 2, 8, 16>}, {transform_indices = @transform_2, window_bounds = array<i64: 2, 8, 16>}, {transform_indices = @transform_3, window_bounds = array<i64: 8, 16>}]} {
    %c0 = arith.constant 0 : index
    %c0_0 = arith.constant 0 : index
    %c0_1 = arith.constant 0 : index
    %c0_2 = arith.constant 0 : index
    %0 = vector.load %arg4[%c0, %c0_0, %c0_1, %c0_2] : memref<2x2x8x16xf32, #tpu.memory_space<vmem>>, vector<2x1x8x16xf32>
    %1 = vector.shape_cast %0 : vector<2x1x8x16xf32> to vector<2x8x16xf32>
    %c0_3 = arith.constant 0 : index
    %c1 = arith.constant 1 : index
    %c0_4 = arith.constant 0 : index
    %c0_5 = arith.constant 0 : index
    %2 = vector.load %arg4[%c0_3, %c1, %c0_4, %c0_5] : memref<2x2x8x16xf32, #tpu.memory_space<vmem>>, vector<2x1x8x16xf32>
    %3 = vector.shape_cast %2 : vector<2x1x8x16xf32> to vector<2x8x16xf32>
    %c0_i32 = arith.constant 0 : i32
    %4 = arith.cmpi eq, %arg1, %c0_i32 : i32
    %5 = arith.extui %4 : i1 to i32
    %c0_i32_6 = arith.constant 0 : i32
    %6 = arith.cmpi ne, %5, %c0_i32_6 : i32
    scf.if %6 {
      %cst_104 = arith.constant 0.000000e+00 : f32
      %156 = vector.broadcast %cst_104 : f32 to vector<8x16xf32>
      %c0_105 = arith.constant 0 : index
      %c0_106 = arith.constant 0 : index
      %157 = vector.load %arg6[%c0_105, %c0_106] : memref<8x16xf32, #tpu.memory_space<vmem>>, vector<8x16xf32>
      tpu.vector_store %arg6[%c0_105, %c0_106], %156 {strides = array<i32>} : memref<8x16xf32, #tpu.memory_space<vmem>>, vector<8x16xf32>,
      %158 = arith.mulf %1, %1 : vector<2x8x16xf32>
      %159 = arith.mulf %3, %3 : vector<2x8x16xf32>
      %160 = arith.addf %158, %159 : vector<2x8x16xf32>
      %c0_107 = arith.constant 0 : index
      %c0_108 = arith.constant 0 : index
      %c0_109 = arith.constant 0 : index
      %161 = vector.load %arg5[%c0_107, %c0_108, %c0_109] : memref<2x8x16xf32, #tpu.memory_space<vmem>>, vector<2x8x16xf32>
      %cst_110 = arith.constant 5.000000e-01 : f32
      %162 = vector.broadcast %cst_110 : f32 to vector<2x8x16xf32>
      %163 = arith.cmpf oge, %161, %162 : vector<2x8x16xf32>
      %cst_111 = arith.constant 4.000000e+00 : f32
      %164 = vector.broadcast %cst_111 : f32 to vector<2x8x16xf32>
      %165 = arith.cmpf olt, %160, %164 : vector<2x8x16xf32>
      %166 = arith.andi %163, %165 : vector<2x8x16xi1>
      %167 = arith.extui %166 : vector<2x8x16xi1> to vector<2x8x16xi32>
      %168 = arith.sitofp %167 : vector<2x8x16xi32> to vector<2x8x16xf32>
      %c0_112 = arith.constant 0 : index
      %c0_113 = arith.constant 0 : index
      %c0_114 = arith.constant 0 : index
      %169 = vector.load %arg7[%c0_112, %c0_113, %c0_114] : memref<2x8x16xf32, #tpu.memory_space<vmem>>, vector<2x8x16xf32>
      tpu.vector_store %arg7[%c0_112, %c0_113, %c0_114], %168 {strides = array<i32>} : memref<2x8x16xf32, #tpu.memory_space<vmem>>, vector<2x8x16xf32>,
    } else {
    }
    %c0_7 = arith.constant 0 : index
    %c0_8 = arith.constant 0 : index
    %c0_9 = arith.constant 0 : index
    %7 = vector.load %arg7[%c0_7, %c0_8, %c0_9] : memref<2x8x16xf32, #tpu.memory_space<vmem>>, vector<2x8x16xf32>
    %cst = arith.constant 0.000000e+00 : f32
    %8 = vector.broadcast %cst : f32 to vector<8x16xf32>
    %c0_10 = arith.constant 0 : index
    %c0_11 = arith.constant 0 : index
    %c0_12 = arith.constant 0 : index
    %c0_13 = arith.constant 0 : index
    %c0_14 = arith.constant 0 : index
    %9 = vector.load %arg3[%c0_10, %c0_11, %c0_12, %c0_13, %c0_14] : memref<8x2x2x8x16xf32, #tpu.memory_space<vmem>>, vector<1x2x1x8x16xf32>
    %10 = vector.shape_cast %9 : vector<1x2x1x8x16xf32> to vector<2x8x16xf32>
    %c0_15 = arith.constant 0 : index
    %c0_16 = arith.constant 0 : index
    %c1_17 = arith.constant 1 : index
    %c0_18 = arith.constant 0 : index
    %c0_19 = arith.constant 0 : index
    %11 = vector.load %arg3[%c0_15, %c0_16, %c1_17, %c0_18, %c0_19] : memref<8x2x2x8x16xf32, #tpu.memory_space<vmem>>, vector<1x2x1x8x16xf32>
    %12 = vector.shape_cast %11 : vector<1x2x1x8x16xf32> to vector<2x8x16xf32>
    %13 = arith.subf %10, %1 : vector<2x8x16xf32>
    %14 = math.absf %13 : vector<2x8x16xf32>
    %15 = arith.subf %12, %3 : vector<2x8x16xf32>
    %16 = math.absf %15 : vector<2x8x16xf32>
    %17 = arith.addf %14, %16 : vector<2x8x16xf32>
    %18 = arith.mulf %7, %17 : vector<2x8x16xf32>
    %cst_20 = arith.constant dense<0.000000e+00> : vector<8x16xf32>
    %19 = vector.multi_reduction <add>, %18, %cst_20 [0] : vector<2x8x16xf32> to vector<8x16xf32>
    %c8_i32 = arith.constant 8 : i32
    %20 = arith.muli %arg1, %c8_i32 : i32
    %c0_i32_21 = arith.constant 0 : i32
    %21 = arith.addi %20, %c0_i32_21 : i32
    %22 = arith.index_cast %21 : i32 to index
    %23 = memref.load %arg2[%22] : memref<8xf32, #tpu.memory_space<smem>>
    %24 = vector.broadcast %23 : f32 to vector<8x16xf32>
    %25 = arith.mulf %24, %19 : vector<8x16xf32>
    %26 = arith.addf %8, %25 : vector<8x16xf32>
    %c1_22 = arith.constant 1 : index
    %c0_23 = arith.constant 0 : index
    %c0_24 = arith.constant 0 : index
    %c0_25 = arith.constant 0 : index
    %c0_26 = arith.constant 0 : index
    %27 = vector.load %arg3[%c1_22, %c0_23, %c0_24, %c0_25, %c0_26] : memref<8x2x2x8x16xf32, #tpu.memory_space<vmem>>, vector<1x2x1x8x16xf32>
    %28 = vector.shape_cast %27 : vector<1x2x1x8x16xf32> to vector<2x8x16xf32>
    %c1_27 = arith.constant 1 : index
    %c0_28 = arith.constant 0 : index
    %c1_29 = arith.constant 1 : index
    %c0_30 = arith.constant 0 : index
    %c0_31 = arith.constant 0 : index
    %29 = vector.load %arg3[%c1_27, %c0_28, %c1_29, %c0_30, %c0_31] : memref<8x2x2x8x16xf32, #tpu.memory_space<vmem>>, vector<1x2x1x8x16xf32>
    %30 = vector.shape_cast %29 : vector<1x2x1x8x16xf32> to vector<2x8x16xf32>
    %31 = arith.subf %28, %1 : vector<2x8x16xf32>
    %32 = math.absf %31 : vector<2x8x16xf32>
    %33 = arith.subf %30, %3 : vector<2x8x16xf32>
    %34 = math.absf %33 : vector<2x8x16xf32>
    %35 = arith.addf %32, %34 : vector<2x8x16xf32>
    %36 = arith.mulf %7, %35 : vector<2x8x16xf32>
    %cst_32 = arith.constant dense<0.000000e+00> : vector<8x16xf32>
    %37 = vector.multi_reduction <add>, %36, %cst_32 [0] : vector<2x8x16xf32> to vector<8x16xf32>
    %c8_i32_33 = arith.constant 8 : i32
    %38 = arith.muli %arg1, %c8_i32_33 : i32
    %c1_i32 = arith.constant 1 : i32
    %39 = arith.addi %38, %c1_i32 : i32
    %40 = arith.index_cast %39 : i32 to index
    %41 = memref.load %arg2[%40] : memref<8xf32, #tpu.memory_space<smem>>
    %42 = vector.broadcast %41 : f32 to vector<8x16xf32>
    %43 = arith.mulf %42, %37 : vector<8x16xf32>
    %44 = arith.addf %26, %43 : vector<8x16xf32>
    %c2 = arith.constant 2 : index
    %c0_34 = arith.constant 0 : index
    %c0_35 = arith.constant 0 : index
    %c0_36 = arith.constant 0 : index
    %c0_37 = arith.constant 0 : index
    %45 = vector.load %arg3[%c2, %c0_34, %c0_35, %c0_36, %c0_37] : memref<8x2x2x8x16xf32, #tpu.memory_space<vmem>>, vector<1x2x1x8x16xf32>
    %46 = vector.shape_cast %45 : vector<1x2x1x8x16xf32> to vector<2x8x16xf32>
    %c2_38 = arith.constant 2 : index
    %c0_39 = arith.constant 0 : index
    %c1_40 = arith.constant 1 : index
    %c0_41 = arith.constant 0 : index
    %c0_42 = arith.constant 0 : index
    %47 = vector.load %arg3[%c2_38, %c0_39, %c1_40, %c0_41, %c0_42] : memref<8x2x2x8x16xf32, #tpu.memory_space<vmem>>, vector<1x2x1x8x16xf32>
    %48 = vector.shape_cast %47 : vector<1x2x1x8x16xf32> to vector<2x8x16xf32>
    %49 = arith.subf %46, %1 : vector<2x8x16xf32>
    %50 = math.absf %49 : vector<2x8x16xf32>
    %51 = arith.subf %48, %3 : vector<2x8x16xf32>
    %52 = math.absf %51 : vector<2x8x16xf32>
    %53 = arith.addf %50, %52 : vector<2x8x16xf32>
    %54 = arith.mulf %7, %53 : vector<2x8x16xf32>
    %cst_43 = arith.constant dense<0.000000e+00> : vector<8x16xf32>
    %55 = vector.multi_reduction <add>, %54, %cst_43 [0] : vector<2x8x16xf32> to vector<8x16xf32>
    %c8_i32_44 = arith.constant 8 : i32
    %56 = arith.muli %arg1, %c8_i32_44 : i32
    %c2_i32 = arith.constant 2 : i32
    %57 = arith.addi %56, %c2_i32 : i32
    %58 = arith.index_cast %57 : i32 to index
    %59 = memref.load %arg2[%58] : memref<8xf32, #tpu.memory_space<smem>>
    %60 = vector.broadcast %59 : f32 to vector<8x16xf32>
    %61 = arith.mulf %60, %55 : vector<8x16xf32>
    %62 = arith.addf %44, %61 : vector<8x16xf32>
    %c3 = arith.constant 3 : index
    %c0_45 = arith.constant 0 : index
    %c0_46 = arith.constant 0 : index
    %c0_47 = arith.constant 0 : index
    %c0_48 = arith.constant 0 : index
    %63 = vector.load %arg3[%c3, %c0_45, %c0_46, %c0_47, %c0_48] : memref<8x2x2x8x16xf32, #tpu.memory_space<vmem>>, vector<1x2x1x8x16xf32>
    %64 = vector.shape_cast %63 : vector<1x2x1x8x16xf32> to vector<2x8x16xf32>
    %c3_49 = arith.constant 3 : index
    %c0_50 = arith.constant 0 : index
    %c1_51 = arith.constant 1 : index
    %c0_52 = arith.constant 0 : index
    %c0_53 = arith.constant 0 : index
    %65 = vector.load %arg3[%c3_49, %c0_50, %c1_51, %c0_52, %c0_53] : memref<8x2x2x8x16xf32, #tpu.memory_space<vmem>>, vector<1x2x1x8x16xf32>
    %66 = vector.shape_cast %65 : vector<1x2x1x8x16xf32> to vector<2x8x16xf32>
    %67 = arith.subf %64, %1 : vector<2x8x16xf32>
    %68 = math.absf %67 : vector<2x8x16xf32>
    %69 = arith.subf %66, %3 : vector<2x8x16xf32>
    %70 = math.absf %69 : vector<2x8x16xf32>
    %71 = arith.addf %68, %70 : vector<2x8x16xf32>
    %72 = arith.mulf %7, %71 : vector<2x8x16xf32>
    %cst_54 = arith.constant dense<0.000000e+00> : vector<8x16xf32>
    %73 = vector.multi_reduction <add>, %72, %cst_54 [0] : vector<2x8x16xf32> to vector<8x16xf32>
    %c8_i32_55 = arith.constant 8 : i32
    %74 = arith.muli %arg1, %c8_i32_55 : i32
    %c3_i32 = arith.constant 3 : i32
    %75 = arith.addi %74, %c3_i32 : i32
    %76 = arith.index_cast %75 : i32 to index
    %77 = memref.load %arg2[%76] : memref<8xf32, #tpu.memory_space<smem>>
    %78 = vector.broadcast %77 : f32 to vector<8x16xf32>
    %79 = arith.mulf %78, %73 : vector<8x16xf32>
    %80 = arith.addf %62, %79 : vector<8x16xf32>
    %c4 = arith.constant 4 : index
    %c0_56 = arith.constant 0 : index
    %c0_57 = arith.constant 0 : index
    %c0_58 = arith.constant 0 : index
    %c0_59 = arith.constant 0 : index
    %81 = vector.load %arg3[%c4, %c0_56, %c0_57, %c0_58, %c0_59] : memref<8x2x2x8x16xf32, #tpu.memory_space<vmem>>, vector<1x2x1x8x16xf32>
    %82 = vector.shape_cast %81 : vector<1x2x1x8x16xf32> to vector<2x8x16xf32>
    %c4_60 = arith.constant 4 : index
    %c0_61 = arith.constant 0 : index
    %c1_62 = arith.constant 1 : index
    %c0_63 = arith.constant 0 : index
    %c0_64 = arith.constant 0 : index
    %83 = vector.load %arg3[%c4_60, %c0_61, %c1_62, %c0_63, %c0_64] : memref<8x2x2x8x16xf32, #tpu.memory_space<vmem>>, vector<1x2x1x8x16xf32>
    %84 = vector.shape_cast %83 : vector<1x2x1x8x16xf32> to vector<2x8x16xf32>
    %85 = arith.subf %82, %1 : vector<2x8x16xf32>
    %86 = math.absf %85 : vector<2x8x16xf32>
    %87 = arith.subf %84, %3 : vector<2x8x16xf32>
    %88 = math.absf %87 : vector<2x8x16xf32>
    %89 = arith.addf %86, %88 : vector<2x8x16xf32>
    %90 = arith.mulf %7, %89 : vector<2x8x16xf32>
    %cst_65 = arith.constant dense<0.000000e+00> : vector<8x16xf32>
    %91 = vector.multi_reduction <add>, %90, %cst_65 [0] : vector<2x8x16xf32> to vector<8x16xf32>
    %c8_i32_66 = arith.constant 8 : i32
    %92 = arith.muli %arg1, %c8_i32_66 : i32
    %c4_i32 = arith.constant 4 : i32
    %93 = arith.addi %92, %c4_i32 : i32
    %94 = arith.index_cast %93 : i32 to index
    %95 = memref.load %arg2[%94] : memref<8xf32, #tpu.memory_space<smem>>
    %96 = vector.broadcast %95 : f32 to vector<8x16xf32>
    %97 = arith.mulf %96, %91 : vector<8x16xf32>
    %98 = arith.addf %80, %97 : vector<8x16xf32>
    %c5 = arith.constant 5 : index
    %c0_67 = arith.constant 0 : index
    %c0_68 = arith.constant 0 : index
    %c0_69 = arith.constant 0 : index
    %c0_70 = arith.constant 0 : index
    %99 = vector.load %arg3[%c5, %c0_67, %c0_68, %c0_69, %c0_70] : memref<8x2x2x8x16xf32, #tpu.memory_space<vmem>>, vector<1x2x1x8x16xf32>
    %100 = vector.shape_cast %99 : vector<1x2x1x8x16xf32> to vector<2x8x16xf32>
    %c5_71 = arith.constant 5 : index
    %c0_72 = arith.constant 0 : index
    %c1_73 = arith.constant 1 : index
    %c0_74 = arith.constant 0 : index
    %c0_75 = arith.constant 0 : index
    %101 = vector.load %arg3[%c5_71, %c0_72, %c1_73, %c0_74, %c0_75] : memref<8x2x2x8x16xf32, #tpu.memory_space<vmem>>, vector<1x2x1x8x16xf32>
    %102 = vector.shape_cast %101 : vector<1x2x1x8x16xf32> to vector<2x8x16xf32>
    %103 = arith.subf %100, %1 : vector<2x8x16xf32>
    %104 = math.absf %103 : vector<2x8x16xf32>
    %105 = arith.subf %102, %3 : vector<2x8x16xf32>
    %106 = math.absf %105 : vector<2x8x16xf32>
    %107 = arith.addf %104, %106 : vector<2x8x16xf32>
    %108 = arith.mulf %7, %107 : vector<2x8x16xf32>
    %cst_76 = arith.constant dense<0.000000e+00> : vector<8x16xf32>
    %109 = vector.multi_reduction <add>, %108, %cst_76 [0] : vector<2x8x16xf32> to vector<8x16xf32>
    %c8_i32_77 = arith.constant 8 : i32
    %110 = arith.muli %arg1, %c8_i32_77 : i32
    %c5_i32 = arith.constant 5 : i32
    %111 = arith.addi %110, %c5_i32 : i32
    %112 = arith.index_cast %111 : i32 to index
    %113 = memref.load %arg2[%112] : memref<8xf32, #tpu.memory_space<smem>>
    %114 = vector.broadcast %113 : f32 to vector<8x16xf32>
    %115 = arith.mulf %114, %109 : vector<8x16xf32>
    %116 = arith.addf %98, %115 : vector<8x16xf32>
    %c6 = arith.constant 6 : index
    %c0_78 = arith.constant 0 : index
    %c0_79 = arith.constant 0 : index
    %c0_80 = arith.constant 0 : index
    %c0_81 = arith.constant 0 : index
    %117 = vector.load %arg3[%c6, %c0_78, %c0_79, %c0_80, %c0_81] : memref<8x2x2x8x16xf32, #tpu.memory_space<vmem>>, vector<1x2x1x8x16xf32>
    %118 = vector.shape_cast %117 : vector<1x2x1x8x16xf32> to vector<2x8x16xf32>
    %c6_82 = arith.constant 6 : index
    %c0_83 = arith.constant 0 : index
    %c1_84 = arith.constant 1 : index
    %c0_85 = arith.constant 0 : index
    %c0_86 = arith.constant 0 : index
    %119 = vector.load %arg3[%c6_82, %c0_83, %c1_84, %c0_85, %c0_86] : memref<8x2x2x8x16xf32, #tpu.memory_space<vmem>>, vector<1x2x1x8x16xf32>
    %120 = vector.shape_cast %119 : vector<1x2x1x8x16xf32> to vector<2x8x16xf32>
    %121 = arith.subf %118, %1 : vector<2x8x16xf32>
    %122 = math.absf %121 : vector<2x8x16xf32>
    %123 = arith.subf %120, %3 : vector<2x8x16xf32>
    %124 = math.absf %123 : vector<2x8x16xf32>
    %125 = arith.addf %122, %124 : vector<2x8x16xf32>
    %126 = arith.mulf %7, %125 : vector<2x8x16xf32>
    %cst_87 = arith.constant dense<0.000000e+00> : vector<8x16xf32>
    %127 = vector.multi_reduction <add>, %126, %cst_87 [0] : vector<2x8x16xf32> to vector<8x16xf32>
    %c8_i32_88 = arith.constant 8 : i32
    %128 = arith.muli %arg1, %c8_i32_88 : i32
    %c6_i32 = arith.constant 6 : i32
    %129 = arith.addi %128, %c6_i32 : i32
    %130 = arith.index_cast %129 : i32 to index
    %131 = memref.load %arg2[%130] : memref<8xf32, #tpu.memory_space<smem>>
    %132 = vector.broadcast %131 : f32 to vector<8x16xf32>
    %133 = arith.mulf %132, %127 : vector<8x16xf32>
    %134 = arith.addf %116, %133 : vector<8x16xf32>
    %c7 = arith.constant 7 : index
    %c0_89 = arith.constant 0 : index
    %c0_90 = arith.constant 0 : index
    %c0_91 = arith.constant 0 : index
    %c0_92 = arith.constant 0 : index
    %135 = vector.load %arg3[%c7, %c0_89, %c0_90, %c0_91, %c0_92] : memref<8x2x2x8x16xf32, #tpu.memory_space<vmem>>, vector<1x2x1x8x16xf32>
    %136 = vector.shape_cast %135 : vector<1x2x1x8x16xf32> to vector<2x8x16xf32>
    %c7_93 = arith.constant 7 : index
    %c0_94 = arith.constant 0 : index
    %c1_95 = arith.constant 1 : index
    %c0_96 = arith.constant 0 : index
    %c0_97 = arith.constant 0 : index
    %137 = vector.load %arg3[%c7_93, %c0_94, %c1_95, %c0_96, %c0_97] : memref<8x2x2x8x16xf32, #tpu.memory_space<vmem>>, vector<1x2x1x8x16xf32>
    %138 = vector.shape_cast %137 : vector<1x2x1x8x16xf32> to vector<2x8x16xf32>
    %139 = arith.subf %136, %1 : vector<2x8x16xf32>
    %140 = math.absf %139 : vector<2x8x16xf32>
    %141 = arith.subf %138, %3 : vector<2x8x16xf32>
    %142 = math.absf %141 : vector<2x8x16xf32>
    %143 = arith.addf %140, %142 : vector<2x8x16xf32>
    %144 = arith.mulf %7, %143 : vector<2x8x16xf32>
    %cst_98 = arith.constant dense<0.000000e+00> : vector<8x16xf32>
    %145 = vector.multi_reduction <add>, %144, %cst_98 [0] : vector<2x8x16xf32> to vector<8x16xf32>
    %c8_i32_99 = arith.constant 8 : i32
    %146 = arith.muli %arg1, %c8_i32_99 : i32
    %c7_i32 = arith.constant 7 : i32
    %147 = arith.addi %146, %c7_i32 : i32
    %148 = arith.index_cast %147 : i32 to index
    %149 = memref.load %arg2[%148] : memref<8xf32, #tpu.memory_space<smem>>
    %150 = vector.broadcast %149 : f32 to vector<8x16xf32>
    %151 = arith.mulf %150, %145 : vector<8x16xf32>
    %152 = arith.addf %134, %151 : vector<8x16xf32>
    %c0_100 = arith.constant 0 : index
    %c0_101 = arith.constant 0 : index
    %153 = vector.load %arg6[%c0_100, %c0_101] : memref<8x16xf32, #tpu.memory_space<vmem>>, vector<8x16xf32>
    %154 = arith.addf %153, %152 : vector<8x16xf32>
    %c0_102 = arith.constant 0 : index
    %c0_103 = arith.constant 0 : index
    %155 = vector.load %arg6[%c0_102, %c0_103] : memref<8x16xf32, #tpu.memory_space<vmem>>, vector<8x16xf32>
    tpu.vector_store %arg6[%c0_102, %c0_103], %154 {strides = array<i32>} : memref<8x16xf32, #tpu.memory_space<vmem>>, vector<8x16xf32>,
    return
  }
  func.func @transform_0(%arg0: i32, %arg1: i32, %arg2: memref<8xf32, #tpu.memory_space<smem>>) -> (i32, i32, i32, i32, i32) {
    %c0_i32 = arith.constant 0 : i32
    %c0_i32_0 = arith.constant 0 : i32
    %c0_i32_1 = arith.constant 0 : i32
    %c0_i32_2 = arith.constant 0 : i32
    return %arg1, %c0_i32, %c0_i32_0, %arg0, %c0_i32_1 : i32, i32, i32, i32, i32
  }
  func.func @transform_1(%arg0: i32, %arg1: i32, %arg2: memref<8xf32, #tpu.memory_space<smem>>) -> (i32, i32, i32, i32) {
    %c0_i32 = arith.constant 0 : i32
    %c0_i32_0 = arith.constant 0 : i32
    %c0_i32_1 = arith.constant 0 : i32
    %c0_i32_2 = arith.constant 0 : i32
    return %c0_i32, %c0_i32_0, %arg0, %c0_i32_1 : i32, i32, i32, i32
  }
  func.func @transform_2(%arg0: i32, %arg1: i32, %arg2: memref<8xf32, #tpu.memory_space<smem>>) -> (i32, i32, i32) {
    %c0_i32 = arith.constant 0 : i32
    %c0_i32_0 = arith.constant 0 : i32
    %c0_i32_1 = arith.constant 0 : i32
    return %c0_i32, %arg0, %c0_i32_0 : i32, i32, i32
  }
  func.func @transform_3(%arg0: i32, %arg1: i32, %arg2: memref<8xf32, #tpu.memory_space<smem>>) -> (i32, i32) {
    %c0_i32 = arith.constant 0 : i32
    %c0_i32_0 = arith.constant 0 : i32
    return %arg0, %c0_i32 : i32, i32
  }
}

</mosaic_0001>

<llo_original>
// kernel: tpu_custom_call.1
$region0: #{tpu_custom_call.1}
  #allocation0 [shape = 'u32[]', space=smem, size = 0x4, offset = 0x4, fixed_abs, tag = 'smem constant byte address 0x4 - core index']
  #allocation1 [shape = 'u32[144,128]{1,0:T(1,128)}', space=vmem, size = 0x12000, scoped, tag = 'internal scratch']
  #allocation2 [shape = 'f32[2,8,16]{2,1,0:T(8,128)}', space=vmem, size = 0x2000, scoped, tag = 'scratch operand']
  #allocation3 [shape = 's32[1]{0}', space=sflag, size = 0x4, scoped, tag = 'scoped memory for tpu_custom_call.1']
  #allocation4 [shape = 'u8[512]{0}', space=smem, size = 0x200, scoped, tag = 'prefetched SMEM operand 0']
  %s0 = inlined_call_operand.hbm [shape: f32[8], index: 0, kind: input, shape index: {}]
  %s1 = inlined_call_operand.hbm [shape: f32[8,2,2,16,16], index: 1, kind: input, shape index: {}]
  %s2 = inlined_call_operand.hbm [shape: f32[2,2,16,16], index: 2, kind: input, shape index: {}]
  %s3 = inlined_call_operand.hbm [shape: f32[2,16,16], index: 3, kind: input, shape index: {}]
  %s4 = inlined_call_operand.hbm [shape: f32[16,16], index: 4, kind: output, shape index: {}]
  %s5 = sld [smem:[#allocation0]]
  $region61: #{tpu_custom_call.1} parent=0
    _
  %s7 = ssub.s32 1, %s5
  %s8 = scalar_select 0, %s7, %s5
  %10 = dma.hbm_to_smem %s0, 16, [#allocation4], [#allocation3]
  %11 = dma.done [#allocation3], 16
  %12 = sfence
  $region1: #{tpu_custom_call.1} parent=0
    #allocation5 [shape = 'u8[262144]{0}', space=vmem, size = 0x40000, scoped, tag = 'input window, operand 1']
    #allocation6 [shape = 's32[2]{0}', space=sflag, size = 0x8, scoped, tag = 'scoped memory for tpu_custom_call.1']
    #allocation7 [shape = 's32[2]{0}', space=sflag, size = 0x8, scoped, tag = 'scoped memory for tpu_custom_call.1']
    #allocation8 [shape = 'u8[32768]{0}', space=vmem, size = 0x8000, scoped, tag = 'input window, operand 2']
    #allocation9 [shape = 's32[2]{0}', space=sflag, size = 0x8, scoped, tag = 'scoped memory for tpu_custom_call.1']
    #allocation10 [shape = 'u8[16384]{0}', space=vmem, size = 0x4000, scoped, tag = 'input window, operand 3']
    #allocation11 [shape = 'u8[8192]{0}', space=vmem, size = 0x2000, scoped, tag = 'output window, operand 0']
    %13 = vsyncpa [#allocation6], 0
    %s14 = scalar_lea.sflag [#allocation6], 1
    %15 = vsyncpa %s14, 0
    %16 = vsyncpa [#allocation9], 0
    %s17 = scalar_lea.sflag [#allocation9], 1
    %18 = vsyncpa %s17, 0
    %19 = vsyncpa [#allocation7], 0
    %s20 = scalar_lea.sflag [#allocation7], 1
    %21 = vsyncpa %s20, 0
    loop: start=0, step=1, limit=4
    $region2: #{tpu_custom_call.1} parent=1 // loop_pre_header
      _
    $region3: #{tpu_custom_call.1} parent=1 // loop_header
      %s23 = sphi 0, %s27
      %p24 = scmp.ge.s32.totalorder %s23, 4
      %s30 = sphi 0, %s42
      %s31 = sphi 0, %s38
      %s32 = sphi 0, %s30
      %s33 = sphi 0, %s31
      %s34 = sphi 0, %s32
      %s35 = sphi 0, %s33
      %s47 = sphi 0, %s49
      %s50 = sphi 0, %s47
      %s51 = sphi 0, %s50
      %s67 = sphi 0, %s51
      %s73 = sphi 0, %s75
      %s76 = sphi 0, %s73
      %s77 = sphi 0, %s76
      %s93 = sphi 0, %s77
      %s99 = sphi 0, %s101
      %s102 = sphi 0, %s99
      %s103 = sphi 0, %s102
      %s119 = sphi 0, %s103
      %s125 = sphi 0, %s127
      %s128 = sphi 0, %s125
      %s129 = sphi 0, %s128
      %s145 = sphi 0, %s129
    $region4: #{tpu_custom_call.1} parent=1 // loop_header_branch
      %26 = sbr.rel (%p24) target = $region8
    $region5: #{tpu_custom_call.1} parent=1 // loop_body
      %s28 = ssub.s32 %s23, 1
      %s29 = ssub.s32 %s23, 2
      %s36 = sadd.s32 1, %s31
      %p37 = scmp.ge.s32.totalorder %s36, 1
      %s38 = scalar_select %p37, 0, %s36
      %s39 = sadd.s32 1, %s30
      %s40 = scalar_select %p37, %s39, %s30
      %p41 = scmp.ge.s32.totalorder %s40, 2
      %s42 = scalar_select %p41, 0, %s40
      %s43 = ssub.s32 %s31, %s38
      %s44 = ssub.s32 %s30, %s42
      %s45 = sor.u32 %s43, %s44
      %p46 = scmp.eq.s32.totalorder %s45, 0
      %s48 = sadd.s32 %s47, 1
      %s49 = scalar_select %p46, %s47, %s48
      %p52 = pneg %p46
      %p53 = scmp.eq.s32.totalorder %s23, 1
      %p54 = por %p52, %p53
      %p55 = scmp.ne.s32.totalorder %s47, %s50
      %p56 = scmp.eq.s32.totalorder %s23, 0
      %p57 = por %p55, %p56
      %p58 = scmp.ne.s32.totalorder %s47, %s50
      %p59 = scmp.eq.s32.totalorder %s28, 1
      %p60 = por %p58, %p59
      %p61 = scmp.ne.s32.totalorder %s50, %s51
      %p62 = scmp.eq.s32.totalorder %s28, 0
      %p63 = por %p61, %p62
      %p64 = scmp.ne.s32.totalorder %s50, %s51
      %p65 = scmp.eq.s32.totalorder %s29, 1
      %p66 = por %p64, %p65
      %p68 = scmp.ne.s32.totalorder %s51, %s67
      %p69 = scmp.eq.s32.totalorder %s29, 0
      %p70 = por %p68, %p69
      %s71 = ssub.s32 %s30, %s42
      %p72 = scmp.eq.s32.totalorder %s71, 0
      %s74 = sadd.s32 %s73, 1
      %s75 = scalar_select %p72, %s73, %s74
      %p78 = pneg %p72
      %p79 = scmp.eq.s32.totalorder %s23, 1
      %p80 = por %p78, %p79
      %p81 = scmp.ne.s32.totalorder %s73, %s76
      %p82 = scmp.eq.s32.totalorder %s23, 0
      %p83 = por %p81, %p82
      %p84 = scmp.ne.s32.totalorder %s73, %s76
      %p85 = scmp.eq.s32.totalorder %s28, 1
      %p86 = por %p84, %p85
      %p87 = scmp.ne.s32.totalorder %s76, %s77
      %p88 = scmp.eq.s32.totalorder %s28, 0
      %p89 = por %p87, %p88
      %p90 = scmp.ne.s32.totalorder %s76, %s77
      %p91 = scmp.eq.s32.totalorder %s29, 1
      %p92 = por %p90, %p91
      %p94 = scmp.ne.s32.totalorder %s77, %s93
      %p95 = scmp.eq.s32.totalorder %s29, 0
      %p96 = por %p94, %p95
      %s97 = ssub.s32 %s30, %s42
      %p98 = scmp.eq.s32.totalorder %s97, 0
      %s100 = sadd.s32 %s99, 1
      %s101 = scalar_select %p98, %s99, %s100
      %p104 = pneg %p98
      %p105 = scmp.eq.s32.totalorder %s23, 1
      %p106 = por %p104, %p105
      %p107 = scmp.ne.s32.totalorder %s99, %s102
      %p108 = scmp.eq.s32.totalorder %s23, 0
      %p109 = por %p107, %p108
      %p110 = scmp.ne.s32.totalorder %s99, %s102
      %p111 = scmp.eq.s32.totalorder %s28, 1
      %p112 = por %p110, %p111
      %p113 = scmp.ne.s32.totalorder %s102, %s103
      %p114 = scmp.eq.s32.totalorder %s28, 0
      %p115 = por %p113, %p114
      %p116 = scmp.ne.s32.totalorder %s102, %s103
      %p117 = scmp.eq.s32.totalorder %s29, 1
      %p118 = por %p116, %p117
      %p120 = scmp.ne.s32.totalorder %s103, %s119
      %p121 = scmp.eq.s32.totalorder %s29, 0
      %p122 = por %p120, %p121
      %s123 = ssub.s32 %s30, %s42
      %p124 = scmp.eq.s32.totalorder %s123, 0
      %s126 = sadd.s32 %s125, 1
      %s127 = scalar_select %p124, %s125, %s126
      %p130 = pneg %p124
      %p131 = scmp.eq.s32.totalorder %s23, 1
      %p132 = por %p130, %p131
      %p133 = scmp.ne.s32.totalorder %s125, %s128
      %p134 = scmp.eq.s32.totalorder %s23, 0
      %p135 = por %p133, %p134
      %p136 = scmp.ne.s32.totalorder %s125, %s128
      %p137 = scmp.eq.s32.totalorder %s28, 1
      %p138 = por %p136, %p137
      %p139 = scmp.ne.s32.totalorder %s128, %s129
      %p140 = scmp.eq.s32.totalorder %s28, 0
      %p141 = por %p139, %p140
      %p142 = scmp.ne.s32.totalorder %s128, %s129
      %p143 = scmp.eq.s32.totalorder %s29, 1
      %p144 = por %p142, %p143
      %p146 = scmp.ne.s32.totalorder %s129, %s145
      %p147 = scmp.eq.s32.totalorder %s29, 0
      %p148 = por %p146, %p147
      %p149 = scmp.le.s32.totalorder 1, %s23
      %p150 = scmp.lt.s32.totalorder %s23, 3
      %p151 = pnand %p149, %p150
      %p152 = pneg %p151
      // Predicated region
      $region9: #{tpu_custom_call.1} parent=5 // pred_check
        _
      $region10: #{tpu_custom_call.1} parent=5 // pred_check_branch
        %154 = sbr.rel (%p151) target = $region12
      $region11: #{tpu_custom_call.1} parent=5 // pred_region
        %s155 = ssub.s32 %s23, 1
      $region12: #{tpu_custom_call.1} parent=5 // pred_fallthru
        _
      %p156 = scmp.lt.s32.totalorder %s23, 2
      // Predicated region
      $region13: #{tpu_custom_call.1} parent=5 // pred_check
        %p157 = pneg %p156
      $region14: #{tpu_custom_call.1} parent=5 // pred_check_branch
        %159 = sbr.rel (%p157) target = $region16
      $region15: #{tpu_custom_call.1} parent=5 // pred_region
        // Predicated region
        $region17: #{tpu_custom_call.1} parent=15 // pred_check
          %p160 = pneg %p57
        $region18: #{tpu_custom_call.1} parent=15 // pred_check_branch
          %162 = sbr.rel (%p160) target = $region20
        $region19: #{tpu_custom_call.1} parent=15 // pred_region
          %s163 = sand.u32 %s47, 1
          %s164 = scalar_lea.sflag [#allocation6], %s163
          %s165 = sand.u32 %s47, 1
          %s166 = smul.addr %s165, 256
          %s167 = scalar_lea.vmem [#allocation5], %s166
          %s168 = smul.u32 8, %s31
          %s170 = ssub.s32 4096, 4096
          %171 = vsyncadd %s164, %s170
          %s172 = smul.addr %s168, 8
          %s173 = sadd.s32 %s30, %s172
          %s174 = smul.addr %s173, 128
          %s175 = scalar_lea.hbm %s1, %s174
          %s176 = sshll.u32 %s167, 4
          %s177 = int_to_ptr.vmem [resolvable:$true] %s176
          %182 = dma.hbm_to_vmem [thread:$0]  %s175, 4096, %s177, %s164, 256, 128, 8
        $region20: #{tpu_custom_call.1} parent=15 // pred_fallthru
          _
        // Predicated region
        $region21: #{tpu_custom_call.1} parent=15 // pred_check
          %p183 = pneg %p83
        $region22: #{tpu_custom_call.1} parent=15 // pred_check_branch
          %185 = sbr.rel (%p183) target = $region24
        $region23: #{tpu_custom_call.1} parent=15 // pred_region
          %s186 = sand.u32 %s23, 1
          %s187 = scalar_lea.sflag [#allocation9], %s186
          %s188 = sand.u32 %s73, 1
          %s189 = smul.addr %s188, 32
          %s190 = scalar_lea.vmem [#allocation8], %s189
          %s192 = ssub.s32 512, 512
          %193 = vsyncadd %s187, %s192
          %s194 = smul.addr %s30, 128
          %s195 = scalar_lea.hbm %s2, %s194
          %s196 = sshll.u32 %s190, 4
          %s197 = int_to_ptr.vmem [resolvable:$true] %s196
          %202 = dma.hbm_to_vmem [thread:$0]  %s195, 512, %s197, %s187, 256, 128, 8
        $region24: #{tpu_custom_call.1} parent=15 // pred_fallthru
          _
        // Predicated region
        $region25: #{tpu_custom_call.1} parent=15 // pred_check
          %p203 = pneg %p109
        $region26: #{tpu_custom_call.1} parent=15 // pred_check_branch
          %205 = sbr.rel (%p203) target = $region28
        $region27: #{tpu_custom_call.1} parent=15 // pred_region
          %s206 = sand.u32 %s23, 1
          %s207 = scalar_lea.sflag [#allocation9], %s206
          %s208 = sand.u32 %s99, 1
          %s209 = smul.addr %s208, 16
          %s210 = scalar_lea.vmem [#allocation10], %s209
          %s212 = ssub.s32 256, 256
          %213 = vsyncadd %s207, %s212
          %s214 = smul.addr %s30, 128
          %s215 = scalar_lea.hbm %s3, %s214
          %s216 = sshll.u32 %s210, 4
          %s217 = int_to_ptr.vmem [resolvable:$true] %s216
          %222 = dma.hbm_to_vmem [thread:$0]  %s215, 256, %s217, %s207, 256, 128, 8
        $region28: #{tpu_custom_call.1} parent=15 // pred_fallthru
          _
      $region16: #{tpu_custom_call.1} parent=5 // pred_fallthru
        _
      %p223 = scmp.le.s32.totalorder 1, %s23
      %p224 = scmp.lt.s32.totalorder %s23, 3
      %p225 = pnand %p223, %p224
      %p226 = pneg %p225
      // Predicated region
      $region29: #{tpu_custom_call.1} parent=5 // pred_check
        _
      $region30: #{tpu_custom_call.1} parent=5 // pred_check_branch
        %228 = sbr.rel (%p225) target = $region32
      $region31: #{tpu_custom_call.1} parent=5 // pred_region
        %s229 = ssub.s32 %s23, 1
        %s230 = sand.u32 %s50, 1
        %s231 = scalar_lea.sflag [#allocation6], %s230
        %s232 = sand.u32 %s50, 1
        %s233 = smul.addr %s232, 256
        %s234 = scalar_lea.vmem [#allocation5], %s233
        // Predicated region
        $region33: #{tpu_custom_call.1} parent=31 // pred_check
          %p235 = pneg %p63
        $region34: #{tpu_custom_call.1} parent=31 // pred_check_branch
          %237 = sbr.rel (%p235) target = $region36
        $region35: #{tpu_custom_call.1} parent=31 // pred_region
          %238 = dma.done %s231, 4096
        $region36: #{tpu_custom_call.1} parent=31 // pred_fallthru
          _
        %s239 = sand.u32 %s28, 1
        %s240 = scalar_lea.sflag [#allocation9], %s239
        %s241 = sand.u32 %s76, 1
        %s242 = smul.addr %s241, 32
        %s243 = scalar_lea.vmem [#allocation8], %s242
        // Predicated region
        $region37: #{tpu_custom_call.1} parent=31 // pred_check
          %p244 = pneg %p89
        $region38: #{tpu_custom_call.1} parent=31 // pred_check_branch
          %246 = sbr.rel (%p244) target = $region40
        $region39: #{tpu_custom_call.1} parent=31 // pred_region
          %247 = dma.done %s240, 512
        $region40: #{tpu_custom_call.1} parent=31 // pred_fallthru
          _
        %s248 = sand.u32 %s28, 1
        %s249 = scalar_lea.sflag [#allocation9], %s248
        %s250 = sand.u32 %s102, 1
        %s251 = smul.addr %s250, 16
        %s252 = scalar_lea.vmem [#allocation10], %s251
        // Predicated region
        $region41: #{tpu_custom_call.1} parent=31 // pred_check
          %p253 = pneg %p115
        $region42: #{tpu_custom_call.1} parent=31 // pred_check_branch
          %255 = sbr.rel (%p253) target = $region44
        $region43: #{tpu_custom_call.1} parent=31 // pred_region
          %256 = dma.done %s249, 256
        $region44: #{tpu_custom_call.1} parent=31 // pred_fallthru
          _
        %s257 = sand.u32 %s50, 1
        %s258 = scalar_lea.sflag [#allocation6], %s257
        %s259 = sand.u32 %s50, 1
        %s260 = smul.addr %s259, 256
        %s261 = scalar_lea.vmem [#allocation5], %s260
        %p262 = pneg %p63
        %p263 = pneg %p60
        %s264 = sand.u32 %s28, 1
        %s265 = scalar_lea.sflag [#allocation9], %s264
        %s266 = sand.u32 %s76, 1
        %s267 = smul.addr %s266, 32
        %s268 = scalar_lea.vmem [#allocation8], %s267
        %p269 = pneg %p89
        %p270 = pneg %p86
        %s271 = sand.u32 %s28, 1
        %s272 = scalar_lea.sflag [#allocation9], %s271
        %s273 = sand.u32 %s102, 1
        %s274 = smul.addr %s273, 16
        %s275 = scalar_lea.vmem [#allocation10], %s274
        %p276 = pneg %p115
        %p277 = pneg %p112
        %p278 = pneg %p141
        %p279 = pneg %p138
        %s280 = sand.u32 %s128, 1
        %s281 = scalar_lea.sflag [#allocation7], %s280
        %s282 = sand.u32 %s128, 1
        %s283 = smul.addr %s282, 8
        %s284 = scalar_lea.vmem [#allocation11], %s283
        %s285 = smul.u32 8, %s33
        %v286 = vld [vmem:[%s243] sm:$0xff]
        %v287 = vld [vmem:[%s243 + $0x10] sm:$0xff]
        %s288 = scalar_lea.vmem %s243, 8 [#allocation8]
        %v289 = vld [vmem:[%s288] sm:$0xff]
        %v290 = vld [vmem:[%s288 + $0x10] sm:$0xff]
        %p291 = scmp.eq.s32.totalorder %s33, 0
        // Predicated region
        $region45: #{tpu_custom_call.1} parent=31 // pred_check
          %p292 = pneg %p291
        $region46: #{tpu_custom_call.1} parent=31 // pred_check_branch
          %294 = sbr.rel (%p292) target = $region48
        $region47: #{tpu_custom_call.1} parent=31 // pred_region
          %vm295 = vcmask 130048
          %296 = vst.msk [vmem:[%s284] sm:$0xff] %vm295, 0.0
          %v297 = vmul.f32 %v286, %v286
          %v298 = vmul.f32 %v287, %v287
          %v299 = vmul.f32 %v289, %v289
          %v300 = vmul.f32 %v290, %v290
          %v301 = vadd.f32 %v297, %v299
          %v302 = vadd.f32 %v298, %v300
          %v303 = vld [vmem:[%s252] sm:$0xff]
          %v304 = vld [vmem:[%s252 + $0x8] sm:$0xff]
          %vm305 = vcmp.ge.f32.partialorder %v303, 0.5
          %vm306 = vcmp.ge.f32.partialorder %v304, 0.5
          %vm307 = vcmp.lt.f32.partialorder %v301, 4.0
          %vm308 = vcmp.lt.f32.partialorder %v302, 4.0
          %vm309 = vmand %vm305, %vm307
          %vm310 = vmand %vm306, %vm308
          %v311 = vsel %vm309, 1, 0
          %v312 = vsel %vm310, 1, 0
          %v313 = vcvt.s32.f32 %v311
          %v314 = vcvt.s32.f32 %v312
          %315 = vst.msk [vmem:[#allocation2] sm:$0xff] %vm295, %v313
          %316 = vst.msk [vmem:[#allocation2 + $0x8] sm:$0xff] %vm295, %v314
        $region48: #{tpu_custom_call.1} parent=31 // pred_fallthru
          _
        %v317 = vld [vmem:[#allocation2] sm:$0xff]
        %v318 = vld [vmem:[#allocation2 + $0x8] sm:$0xff]
        %v319 = vld [vmem:[%s234] sm:$0xff]
        %v320 = vld [vmem:[%s234 + $0x10] sm:$0xff]
        %s321 = scalar_lea.vmem %s234, 8 [#allocation5]
        %v322 = vld [vmem:[%s321] sm:$0xff]
        %v323 = vld [vmem:[%s321 + $0x10] sm:$0xff]
        %v324 = vsub.f32 %v319, %v286
        %v325 = vsub.f32 %v320, %v287
        %v326 = vand.u32 2147483647, %v324
        %v327 = vand.u32 2147483647, %v325
        %v328 = vsub.f32 %v322, %v289
        %v329 = vsub.f32 %v323, %v290
        %v330 = vand.u32 2147483647, %v328
        %v331 = vand.u32 2147483647, %v329
        %v332 = vadd.f32 %v326, %v330
        %v333 = vadd.f32 %v327, %v331
        %v334 = vmul.f32 %v317, %v332
        %v335 = vmul.f32 %v318, %v333
        %vm336 = vcmask 130048
        %v337 = vsel %vm336, %v334, 0.0
        %v338 = vsel %vm336, %v335, 0.0
        %v339 = vadd.f32 %v337, %v338
        %s340 = smul.u32 %s33, 8
        %s341 = sld [smem:[#allocation4 + %s340]]
        %v342 = vstv %s341
        %v343 = vmul.f32 %v342, %v339
        %v344 = vadd.f32 %v343, 0.0
        %s345 = scalar_lea.vmem %s234, 32 [#allocation5]
        %v346 = vld [vmem:[%s345] sm:$0xff]
        %v347 = vld [vmem:[%s345 + $0x10] sm:$0xff]
        %s348 = scalar_lea.vmem %s234, 40 [#allocation5]
        %v349 = vld [vmem:[%s348] sm:$0xff]
        %v350 = vld [vmem:[%s348 + $0x10] sm:$0xff]
        %v351 = vsub.f32 %v346, %v286
        %v352 = vsub.f32 %v347, %v287
        %v353 = vand.u32 2147483647, %v351
        %v354 = vand.u32 2147483647, %v352
        %v355 = vsub.f32 %v349, %v289
        %v356 = vsub.f32 %v350, %v290
        %v357 = vand.u32 2147483647, %v355
        %v358 = vand.u32 2147483647, %v356
        %v359 = vadd.f32 %v353, %v357
        %v360 = vadd.f32 %v354, %v358
        %v361 = vmul.f32 %v317, %v359
        %v362 = vmul.f32 %v318, %v360
        %v363 = vsel %vm336, %v361, 0.0
        %v364 = vsel %vm336, %v362, 0.0
        %v365 = vadd.f32 %v363, %v364
        %s366 = sadd.s32 %s340, 1
        %s367 = sld [smem:[#allocation4 + %s366]]
        %v368 = vstv %s367
        %v369 = vmul.f32 %v368, %v365
        %v370 = vadd.f32 %v344, %v369
        %s371 = scalar_lea.vmem %s234, 64 [#allocation5]
        %v372 = vld [vmem:[%s371] sm:$0xff]
        %v373 = vld [vmem:[%s371 + $0x10] sm:$0xff]
        %s374 = scalar_lea.vmem %s234, 72 [#allocation5]
        %v375 = vld [vmem:[%s374] sm:$0xff]
        %v376 = vld [vmem:[%s374 + $0x10] sm:$0xff]
        %v377 = vsub.f32 %v372, %v286
        %v378 = vsub.f32 %v373, %v287
        %v379 = vand.u32 2147483647, %v377
        %v380 = vand.u32 2147483647, %v378
        %v381 = vsub.f32 %v375, %v289
        %v382 = vsub.f32 %v376, %v290
        %v383 = vand.u32 2147483647, %v381
        %v384 = vand.u32 2147483647, %v382
        %v385 = vadd.f32 %v379, %v383
        %v386 = vadd.f32 %v380, %v384
        %v387 = vmul.f32 %v317, %v385
        %v388 = vmul.f32 %v318, %v386
        %v389 = vsel %vm336, %v387, 0.0
        %v390 = vsel %vm336, %v388, 0.0
        %v391 = vadd.f32 %v389, %v390
        %s392 = sadd.s32 %s340, 2
        %s393 = sld [smem:[#allocation4 + %s392]]
        %v394 = vstv %s393
        %v395 = vmul.f32 %v394, %v391
        %v396 = vadd.f32 %v370, %v395
        %s397 = scalar_lea.vmem %s234, 96 [#allocation5]
        %v398 = vld [vmem:[%s397] sm:$0xff]
        %v399 = vld [vmem:[%s397 + $0x10] sm:$0xff]
        %s400 = scalar_lea.vmem %s234, 104 [#allocation5]
        %v401 = vld [vmem:[%s400] sm:$0xff]
        %v402 = vld [vmem:[%s400 + $0x10] sm:$0xff]
        %v403 = vsub.f32 %v398, %v286
        %v404 = vsub.f32 %v399, %v287
        %v405 = vand.u32 2147483647, %v403
        %v406 = vand.u32 2147483647, %v404
        %v407 = vsub.f32 %v401, %v289
        %v408 = vsub.f32 %v402, %v290
        %v409 = vand.u32 2147483647, %v407
        %v410 = vand.u32 2147483647, %v408
        %v411 = vadd.f32 %v405, %v409
        %v412 = vadd.f32 %v406, %v410
        %v413 = vmul.f32 %v317, %v411
        %v414 = vmul.f32 %v318, %v412
        %v415 = vsel %vm336, %v413, 0.0
        %v416 = vsel %vm336, %v414, 0.0
        %v417 = vadd.f32 %v415, %v416
        %s418 = sadd.s32 %s340, 3
        %s419 = sld [smem:[#allocation4 + %s418]]
        %v420 = vstv %s419
        %v421 = vmul.f32 %v420, %v417
        %v422 = vadd.f32 %v396, %v421
        %s423 = scalar_lea.vmem %s234, 128 [#allocation5]
        %v424 = vld [vmem:[%s423] sm:$0xff]
        %v425 = vld [vmem:[%s423 + $0x10] sm:$0xff]
        %s426 = scalar_lea.vmem %s234, 136 [#allocation5]
        %v427 = vld [vmem:[%s426] sm:$0xff]
        %v428 = vld [vmem:[%s426 + $0x10] sm:$0xff]
        %v429 = vsub.f32 %v424, %v286
        %v430 = vsub.f32 %v425, %v287
        %v431 = vand.u32 2147483647, %v429
        %v432 = vand.u32 2147483647, %v430
        %v433 = vsub.f32 %v427, %v289
        %v434 = vsub.f32 %v428, %v290
        %v435 = vand.u32 2147483647, %v433
        %v436 = vand.u32 2147483647, %v434
        %v437 = vadd.f32 %v431, %v435
        %v438 = vadd.f32 %v432, %v436
        %v439 = vmul.f32 %v317, %v437
        %v440 = vmul.f32 %v318, %v438
        %v441 = vsel %vm336, %v439, 0.0
        %v442 = vsel %vm336, %v440, 0.0
        %v443 = vadd.f32 %v441, %v442
        %s444 = sadd.s32 %s340, 4
        %s445 = sld [smem:[#allocation4 + %s444]]
        %v446 = vstv %s445
        %v447 = vmul.f32 %v446, %v443
        %v448 = vadd.f32 %v422, %v447
        %s449 = scalar_lea.vmem %s234, 160 [#allocation5]
        %v450 = vld [vmem:[%s449] sm:$0xff]
        %v451 = vld [vmem:[%s449 + $0x10] sm:$0xff]
        %s452 = scalar_lea.vmem %s234, 168 [#allocation5]
        %v453 = vld [vmem:[%s452] sm:$0xff]
        %v454 = vld [vmem:[%s452 + $0x10] sm:$0xff]
        %v455 = vsub.f32 %v450, %v286
        %v456 = vsub.f32 %v451, %v287
        %v457 = vand.u32 2147483647, %v455
        %v458 = vand.u32 2147483647, %v456
        %v459 = vsub.f32 %v453, %v289
        %v460 = vsub.f32 %v454, %v290
        %v461 = vand.u32 2147483647, %v459
        %v462 = vand.u32 2147483647, %v460
        %v463 = vadd.f32 %v457, %v461
        %v464 = vadd.f32 %v458, %v462
        %v465 = vmul.f32 %v317, %v463
        %v466 = vmul.f32 %v318, %v464
        %v467 = vsel %vm336, %v465, 0.0
        %v468 = vsel %vm336, %v466, 0.0
        %v469 = vadd.f32 %v467, %v468
        %s470 = sadd.s32 %s340, 5
        %s471 = sld [smem:[#allocation4 + %s470]]
        %v472 = vstv %s471
        %v473 = vmul.f32 %v472, %v469
        %v474 = vadd.f32 %v448, %v473
        %s475 = scalar_lea.vmem %s234, 192 [#allocation5]
        %v476 = vld [vmem:[%s475] sm:$0xff]
        %v477 = vld [vmem:[%s475 + $0x10] sm:$0xff]
        %s478 = scalar_lea.vmem %s234, 200 [#allocation5]
        %v479 = vld [vmem:[%s478] sm:$0xff]
        %v480 = vld [vmem:[%s478 + $0x10] sm:$0xff]
        %v481 = vsub.f32 %v476, %v286
        %v482 = vsub.f32 %v477, %v287
        %v483 = vand.u32 2147483647, %v481
        %v484 = vand.u32 2147483647, %v482
        %v485 = vsub.f32 %v479, %v289
        %v486 = vsub.f32 %v480, %v290
        %v487 = vand.u32 2147483647, %v485
        %v488 = vand.u32 2147483647, %v486
        %v489 = vadd.f32 %v483, %v487
        %v490 = vadd.f32 %v484, %v488
        %v491 = vmul.f32 %v317, %v489
        %v492 = vmul.f32 %v318, %v490
        %v493 = vsel %vm336, %v491, 0.0
        %v494 = vsel %vm336, %v492, 0.0
        %v495 = vadd.f32 %v493, %v494
        %s496 = sadd.s32 %s340, 6
        %s497 = sld [smem:[#allocation4 + %s496]]
        %v498 = vstv %s497
        %v499 = vmul.f32 %v498, %v495
        %v500 = vadd.f32 %v474, %v499
        %s501 = scalar_lea.vmem %s234, 224 [#allocation5]
        %v502 = vld [vmem:[%s501] sm:$0xff]
        %v503 = vld [vmem:[%s501 + $0x10] sm:$0xff]
        %s504 = scalar_lea.vmem %s234, 232 [#allocation5]
        %v505 = vld [vmem:[%s504] sm:$0xff]
        %v506 = vld [vmem:[%s504 + $0x10] sm:$0xff]
        %v507 = vsub.f32 %v502, %v286
        %v508 = vsub.f32 %v503, %v287
        %v509 = vand.u32 2147483647, %v507
        %v510 = vand.u32 2147483647, %v508
        %v511 = vsub.f32 %v505, %v289
        %v512 = vsub.f32 %v506, %v290
        %v513 = vand.u32 2147483647, %v511
        %v514 = vand.u32 2147483647, %v512
        %v515 = vadd.f32 %v509, %v513
        %v516 = vadd.f32 %v510, %v514
        %v517 = vmul.f32 %v317, %v515
        %v518 = vmul.f32 %v318, %v516
        %v519 = vsel %vm336, %v517, 0.0
        %v520 = vsel %vm336, %v518, 0.0
        %v521 = vadd.f32 %v519, %v520
        %s522 = sadd.s32 %s340, 7
        %s523 = sld [smem:[#allocation4 + %s522]]
        %v524 = vstv %s523
        %v525 = vmul.f32 %v524, %v521
        %v526 = vadd.f32 %v500, %v525
        %v527 = vld [vmem:[%s284] sm:$0xff]
        %v528 = vadd.f32 %v527, %v526
        %529 = vst.msk [vmem:[%s284] sm:$0xff] %vm336, %v528
        %s530 = sand.u32 %s128, 1
        %s531 = scalar_lea.sflag [#allocation7], %s530
        %s532 = sand.u32 %s128, 1
        %s533 = smul.addr %s532, 8
        %s534 = scalar_lea.vmem [#allocation11], %s533
        // Predicated region
        $region49: #{tpu_custom_call.1} parent=31 // pred_check
          %p535 = pneg %p138
        $region50: #{tpu_custom_call.1} parent=31 // pred_check_branch
          %537 = sbr.rel (%p535) target = $region52
        $region51: #{tpu_custom_call.1} parent=31 // pred_region
          %s539 = ssub.s32 128, 128
          %540 = vsyncadd %s531, %s539
          %s541 = smul.addr %s32, 128
          %s542 = scalar_lea.hbm %s4, %s541
          %s544 = sshll.u32 %s534, 4
          %s545 = int_to_ptr.vmem [resolvable:$true] %s544
          %547 = dma.vmem_to_hbm [thread:$0]  %s545, 128, %s542, %s531
        $region52: #{tpu_custom_call.1} parent=31 // pred_fallthru
          _
      $region32: #{tpu_custom_call.1} parent=5 // pred_fallthru
        _
      %p548 = scmp.le.s32.totalorder 2, %s23
      // Predicated region
      $region53: #{tpu_custom_call.1} parent=5 // pred_check
        %p549 = pneg %p548
      $region54: #{tpu_custom_call.1} parent=5 // pred_check_branch
        %551 = sbr.rel (%p549) target = $region56
      $region55: #{tpu_custom_call.1} parent=5 // pred_region
        %s552 = ssub.s32 %s23, 2
        // Predicated region
        $region57: #{tpu_custom_call.1} parent=55 // pred_check
          %p553 = pneg %p144
        $region58: #{tpu_custom_call.1} parent=55 // pred_check_branch
          %555 = sbr.rel (%p553) target = $region60
        $region59: #{tpu_custom_call.1} parent=55 // pred_region
          %s556 = sand.u32 %s129, 1
          %s557 = scalar_lea.sflag [#allocation7], %s556
          %s558 = sand.u32 %s129, 1
          %s559 = smul.addr %s558, 8
          %s560 = scalar_lea.vmem [#allocation11], %s559
          %561 = dma.done %s557, 128
        $region60: #{tpu_custom_call.1} parent=55 // pred_fallthru
          _
      $region56: #{tpu_custom_call.1} parent=5 // pred_fallthru
        _
    $region6: #{tpu_custom_call.1} parent=1 // loop_footer
      %s27 = sadd.s32 1, %s23
    $region7: #{tpu_custom_call.1} parent=1 // loop_footer_branch
      %22 = sbr.rel target = $region3
    $region8: #{tpu_custom_call.1} parent=1 // loop_exit
      _
    %562 = vsyncpa [#allocation6], 1
    %s563 = scalar_lea.sflag [#allocation6], 1
    %564 = vsyncpa %s563, 1
    %565 = vsyncpa [#allocation9], 1
    %s566 = scalar_lea.sflag [#allocation9], 1
    %567 = vsyncpa %s566, 1
    %568 = vsyncpa [#allocation7], 1
    %s569 = scalar_lea.sflag [#allocation7], 1
    %570 = vsyncpa %s569, 1

</llo_original>
